<compile_context>
chip_gen: v7x
topology: tpu7x:2x2x1
jax: 0.10.0
libtpu: 0.0.40
codegen_flags: <defaults>
</compile_context>

<pallas_src>
import numpy as np
import jax
import jax.numpy as jnp
from jax.experimental import pallas as pl
from jax.experimental.pallas import tpu as pltpu

VAE_SCALING_FACTOR = 0.18215       # stabilityai/sd-vae-ft-mse config.scaling_factor
LATENT_TILED_SIZE = 8              # args.latent_tiled_size (small, for demo shapes)
LATENT_TILED_OVERLAP = 4           # args.latent_tiled_overlap


# ----------------------------------------------------------------------------
# Glue: same math as TADM_Tile._gaussian_weights (identical across channels so
# only the (T, T) map is needed).
# ----------------------------------------------------------------------------
def gaussian_weights(tile_width, tile_height):
    var = 0.01
    midpoint = (tile_width - 1) / 2
    x_probs = [np.exp(-(x - midpoint) * (x - midpoint) / (tile_width * tile_width) / (2 * var))
               / np.sqrt(2 * np.pi * var) for x in range(tile_width)]
    midpoint = tile_height / 2
    y_probs = [np.exp(-(y - midpoint) * (y - midpoint) / (tile_height * tile_height) / (2 * var))
               / np.sqrt(2 * np.pi * var) for y in range(tile_height)]
    return np.outer(y_probs, x_probs).astype(np.float32)


# ----------------------------------------------------------------------------
# Glue: exact replication of the tile-grid / offset logic from forward().
# ----------------------------------------------------------------------------
def compute_tile_offsets(h, w, tile_size, tile_overlap):
    grid_rows = 0
    cur_x = 0
    while cur_x < w:
        cur_x = max(grid_rows * tile_size - tile_overlap * grid_rows, 0) + tile_size
        grid_rows += 1
    grid_cols = 0
    cur_y = 0
    while cur_y < h:
        cur_y = max(grid_cols * tile_size - tile_overlap * grid_cols, 0) + tile_size
        grid_cols += 1

    offsets = []
    ofs_x = 0
    ofs_y = 0
    for row in range(grid_rows):
        for col in range(grid_cols):
            if col < grid_cols - 1 or row < grid_rows - 1:
                ofs_x = max(row * tile_size - tile_overlap * row, 0)
                ofs_y = max(col * tile_size - tile_overlap * col, 0)
            if row == grid_rows - 1:
                ofs_x = w - tile_size
            if col == grid_cols - 1:
                ofs_y = h - tile_size
            offsets.append((ofs_y, ofs_x))
    return offsets


# ----------------------------------------------------------------------------
# Host precompute: fold contributor normalization and 1/scaling into per-tile
# weights.  contrib is a compile-time constant of the tile geometry, so dividing
# by it (and by the VAE scale) inside the kernel on every invocation is waste.
# ----------------------------------------------------------------------------
def normalized_tile_weights(offsets, T, H, W, scaling):
    w = gaussian_weights(T, T)                                    # (T, T) f32
    contrib = np.zeros((H, W), np.float32)
    for (oy, ox) in offsets:
        contrib[oy:oy + T, ox:ox + T] += w
    assert np.all(contrib > 0.0), "tile grid must cover the full latent"
    inv_scale = np.float32(1.0 / scaling)
    w_norm = np.stack([(w / contrib[oy:oy + T, ox:ox + T]) * inv_scale
                       for (oy, ox) in offsets]).astype(np.float32)   # (n_tiles, T, T)
    return w, w_norm


# ----------------------------------------------------------------------------
# Deterministic surrogates for the external pretrained modules.
# ----------------------------------------------------------------------------
def _surrogate_caption_enc():
    # TODO(synk): CLIP tokenizer / text_encoder are external pretrained models; constant stand-in.
    return jnp.float32(0.02)


def _timemapping(x):
    # TODO(synk): TimeMapping is an external pretrained module; deterministic surrogate.
    return 50.0 + 10.0 * jnp.tanh(jnp.mean(x, axis=(1, 2, 3)))      # (B,)


def _unet(x, t, enc):
    # TODO(synk): UNet2DConditionModel is an external pretrained model; deterministic surrogate.
    return 0.3 * x + 0.001 * t[:, None, None, None] + 0.01 * enc


def _refiner(x, pred, t):
    # TODO(synk): Refiner is an external pretrained module; deterministic surrogate.
    return x - 0.5 * pred


def _sched_step(pred, x):
    # TODO(synk): diffusers 1-step scheduler; deterministic surrogate for .step(...).prev_sample.
    return x - 0.1 * pred


def _vae_decode(z):
    # TODO(synk): pretrained VAE decoder; identity surrogate (clamp is applied in the kernel).
    return z


def denoise_tiles(lq_latent, offsets, T):
    """Per-tile 'model' pass (matches the per-tile batching behaviour of the torch loop)."""
    enc = _surrogate_caption_enc()
    tiles = []
    for (oy, ox) in offsets:
        x_tile = lq_latent[:, :, oy:oy + T, ox:ox + T]            # (B, C, T, T)
        t = _timemapping(x_tile)
        pred = _unet(x_tile, t, enc)
        x_learned = _refiner(x_tile, pred, t)
        x_sched = _sched_step(pred, x_tile)
        tiles.append(x_learned + x_sched)
    return jnp.stack(tiles, axis=0)                               # (n_tiles, B, C, T, T)


# ----------------------------------------------------------------------------
# Pallas kernel: fused (tile * normalized_weight) accumulation + clamp.
# ----------------------------------------------------------------------------
def _pick_bc_block(BC, n_tiles, T, H, W, in_itemsize, budget_bytes=40 << 20):
    """Largest BC-block whose double-buffered working set fits the VMEM budget
    (budget sized for v7x's 64 MiB VMEM / 32 MiB default scoped limit), while
    keeping >=2 grid steps so the pipeline overlaps and v7x's 2 TCs both get work."""
    divisors = [d for d in range(1, BC + 1) if BC % d == 0]
    best = 1
    for d in divisors:
        resident = (2 * n_tiles * d * T * T * in_itemsize   # double-buffered tiles block
                    + 2 * n_tiles * T * T * 4               # weights (constant block)
                    + 2 * d * H * W * 4)                    # double-buffered output block
        if resident <= budget_bytes:
            best = d
    if best == BC and BC > 1:                               # force >=2 grid steps
        best = [d for d in divisors if d < BC][-1]
    return best


def pallas_blend(tiles, w_norm, offsets, H, W):
    n_tiles, B, C, T, _ = tiles.shape
    BC = B * C
    # Reshape only (contiguous, free).  No host-side astype: tiles are DMA'd in
    # their native dtype (bf16 upstream would halve the dominant HBM read) and
    # cast on the VMEM-resident block inside the kernel.
    tiles_bc = tiles.reshape(n_tiles, BC, T, T)

    bc_blk = _pick_bc_block(BC, n_tiles, T, H, W, tiles_bc.dtype.itemsize)
    grid = (BC // bc_blk,)

    def kernel(tiles_ref, w_ref, out_ref):
        # Accumulate straight into the resident output block (no scratch).
        out_ref[...] = jnp.zeros_like(out_ref)
        # Tile offsets are compile-time constants -> static unroll, static aligned
        # slices (no dynamic lane/sublane offsets in the stores).
        for idx, (oy, ox) in enumerate(offsets):
            wt = tiles_ref[idx].astype(jnp.float32) * w_ref[idx]   # (bc_blk,T,T)*(T,T)
            out_ref[:, oy:oy + T, ox:ox + T] += wt
        # contributors-normalization and 1/scaling are already folded into w_ref;
        # only the clamp of decode(x/scale).clamp(-1,1) remains, done in place.
        out_ref[...] = jnp.clip(out_ref[...], -1.0, 1.0)

    out = pl.pallas_call(
        kernel,
        out_shape=jax.ShapeDtypeStruct((BC, H, W), jnp.float32),
        grid=grid,
        in_specs=[
            pl.BlockSpec((n_tiles, bc_blk, T, T), lambda b: (0, b, 0, 0)),
            pl.BlockSpec((n_tiles, T, T), lambda b: (0, 0, 0)),
        ],
        out_specs=pl.BlockSpec((bc_blk, H, W), lambda b: (b, 0, 0)),
        compiler_params=pltpu.CompilerParams(
            dimension_semantics=("parallel",),        # pipelined; sharded across TCs on v7x
            vmem_limit_bytes=48 << 20,                # explicit, below v7x 64 MiB physical
        ),
    )(tiles_bc, w_norm)
    return out.reshape(B, C, H, W)


# ----------------------------------------------------------------------------
# Full forward (tiled-latent branch of TADM_Tile.forward).
# ----------------------------------------------------------------------------
def tadm_tile_forward(c_t):
    B, C, H, W = c_t.shape
    lq_latent = c_t * VAE_SCALING_FACTOR
    tile_size = min(LATENT_TILED_SIZE, min(H, W))
    assert H * W > tile_size * tile_size, "this demo exercises the tiled branch"

    offsets = compute_tile_offsets(H, W, tile_size, LATENT_TILED_OVERLAP)
    _, w_norm = normalized_tile_weights(offsets, tile_size, H, W, VAE_SCALING_FACTOR)
    tiles = denoise_tiles(lq_latent, offsets, tile_size)          # (n_tiles, B, C, T, T)
    blended = pallas_blend(tiles, jnp.asarray(w_norm), offsets, H, W)
    return _vae_decode(blended)                                   # output_image (B, C, H, W)


# ----------------------------------------------------------------------------
# Pure NumPy reference implementing the ORIGINAL (unfused) formulation:
# (sum_i w * x_i) / contributors, then /scale and clamp.
# ----------------------------------------------------------------------------
def reference_blend(tiles_np, w_np, offsets, H, W, scaling):
    n, B, C, T, _ = tiles_np.shape
    acc = np.zeros((B, C, H, W), np.float32)
    contrib = np.zeros((B, C, H, W), np.float32)
    for idx, (oy, ox) in enumerate(offsets):
        acc[:, :, oy:oy + T, ox:ox + T] += tiles_np[idx] * w_np[None, None]
        contrib[:, :, oy:oy + T, ox:ox + T] += w_np[None, None]
    blended = acc / contrib
    return np.clip(blended * np.float32(1.0 / scaling), -1.0, 1.0)


if __name__ == "__main__":
    key = jax.random.PRNGKey(0)
    B, C, H, W = 2, 4, 16, 16
    c_t = jax.random.normal(key, (B, C, H, W), dtype=jnp.float32)

    out = tadm_tile_forward(c_t)
    out = jax.block_until_ready(out)
    assert out.shape == (B, C, H, W) and out.dtype == jnp.float32

    # Reference check of the Pallas-blended path (original unfused math).
    lq_latent = c_t * VAE_SCALING_FACTOR
    tile_size = min(LATENT_TILED_SIZE, min(H, W))
    offsets = compute_tile_offsets(H, W, tile_size, LATENT_TILED_OVERLAP)
    w_np = gaussian_weights(tile_size, tile_size)
    tiles_np = np.asarray(denoise_tiles(lq_latent, offsets, tile_size), dtype=np.float32)
    ref = reference_blend(tiles_np, w_np, offsets, H, W, VAE_SCALING_FACTOR)

    np.testing.assert_allclose(np.asarray(out), ref, rtol=1e-5, atol=1e-5)
    print("KERNEL_OK")
</pallas_src>

<mosaic_0001>
module attributes {stable_mosaic.version = 11 : i64} {
  func.func @kernel(%arg0: i32, %arg1: memref<9x4x8x8xf32, #tpu.memory_space<vmem>>, %arg2: memref<9x8x8xf32, #tpu.memory_space<vmem>>, %arg3: memref<4x16x16xf32, #tpu.memory_space<vmem>>) attributes {dimension_semantics = [#tpu.dimension_semantics<parallel>], iteration_bounds = array<i64: 2>, scalar_prefetch = 0 : i64, scratch_operands = 0 : i64, tpu.core_type = #tpu.core_type<tc>, window_params = [{transform_indices = @transform_0, window_bounds = array<i64: 9, 4, 8, 8>}, {pipeline_mode = #tpu.pipeline_mode<synchronous>, transform_indices = @transform_1, window_bounds = array<i64: 9, 8, 8>}, {transform_indices = @transform_2, window_bounds = array<i64: 4, 16, 16>}]} {
    %cst = arith.constant 0.000000e+00 : f32
    %0 = vector.broadcast %cst : f32 to vector<4x16x16xf32>
    %c0 = arith.constant 0 : index
    %c0_0 = arith.constant 0 : index
    %c0_1 = arith.constant 0 : index
    %1 = vector.load %arg3[%c0, %c0_0, %c0_1] : memref<4x16x16xf32, #tpu.memory_space<vmem>>, vector<4x16x16xf32>
    tpu.vector_store %arg3[%c0, %c0_0, %c0_1], %0 {strides = array<i32>} : memref<4x16x16xf32, #tpu.memory_space<vmem>>, vector<4x16x16xf32>,
    %c0_2 = arith.constant 0 : index
    %c0_3 = arith.constant 0 : index
    %c0_4 = arith.constant 0 : index
    %c0_5 = arith.constant 0 : index
    %2 = vector.load %arg1[%c0_2, %c0_3, %c0_4, %c0_5] : memref<9x4x8x8xf32, #tpu.memory_space<vmem>>, vector<1x4x8x8xf32>
    %3 = vector.shape_cast %2 : vector<1x4x8x8xf32> to vector<4x8x8xf32>
    %c0_6 = arith.constant 0 : index
    %c0_7 = arith.constant 0 : index
    %c0_8 = arith.constant 0 : index
    %4 = vector.load %arg2[%c0_6, %c0_7, %c0_8] : memref<9x8x8xf32, #tpu.memory_space<vmem>>, vector<1x8x8xf32>
    %5 = vector.shape_cast %4 : vector<1x8x8xf32> to vector<8x8xf32>
    %6 = vector.shape_cast %5 : vector<8x8xf32> to vector<1x8x8xf32>
    %7 = vector.broadcast %6 : vector<1x8x8xf32> to vector<4x8x8xf32>
    %8 = arith.mulf %3, %7 : vector<4x8x8xf32>
    %c0_9 = arith.constant 0 : index
    %c0_10 = arith.constant 0 : index
    %c0_11 = arith.constant 0 : index
    %9 = vector.load %arg3[%c0_9, %c0_10, %c0_11] : memref<4x16x16xf32, #tpu.memory_space<vmem>>, vector<4x8x8xf32>
    %10 = arith.addf %9, %8 : vector<4x8x8xf32>
    %c0_12 = arith.constant 0 : index
    %c0_13 = arith.constant 0 : index
    %c0_14 = arith.constant 0 : index
    %11 = vector.load %arg3[%c0_12, %c0_13, %c0_14] : memref<4x16x16xf32, #tpu.memory_space<vmem>>, vector<4x8x8xf32>
    tpu.vector_store %arg3[%c0_12, %c0_13, %c0_14], %10 {strides = array<i32>} : memref<4x16x16xf32, #tpu.memory_space<vmem>>, vector<4x8x8xf32>,
    %c1 = arith.constant 1 : index
    %c0_15 = arith.constant 0 : index
    %c0_16 = arith.constant 0 : index
    %c0_17 = arith.constant 0 : index
    %12 = vector.load %arg1[%c1, %c0_15, %c0_16, %c0_17] : memref<9x4x8x8xf32, #tpu.memory_space<vmem>>, vector<1x4x8x8xf32>
    %13 = vector.shape_cast %12 : vector<1x4x8x8xf32> to vector<4x8x8xf32>
    %c1_18 = arith.constant 1 : index
    %c0_19 = arith.constant 0 : index
    %c0_20 = arith.constant 0 : index
    %14 = vector.load %arg2[%c1_18, %c0_19, %c0_20] : memref<9x8x8xf32, #tpu.memory_space<vmem>>, vector<1x8x8xf32>
    %15 = vector.shape_cast %14 : vector<1x8x8xf32> to vector<8x8xf32>
    %16 = vector.shape_cast %15 : vector<8x8xf32> to vector<1x8x8xf32>
    %17 = vector.broadcast %16 : vector<1x8x8xf32> to vector<4x8x8xf32>
    %18 = arith.mulf %13, %17 : vector<4x8x8xf32>
    %c0_21 = arith.constant 0 : index
    %c4 = arith.constant 4 : index
    %c0_22 = arith.constant 0 : index
    %19 = vector.load %arg3[%c0_21, %c4, %c0_22] : memref<4x16x16xf32, #tpu.memory_space<vmem>>, vector<4x8x8xf32>
    %20 = arith.addf %19, %18 : vector<4x8x8xf32>
    %c0_23 = arith.constant 0 : index
    %c4_24 = arith.constant 4 : index
    %c0_25 = arith.constant 0 : index
    %21 = vector.load %arg3[%c0_23, %c4_24, %c0_25] : memref<4x16x16xf32, #tpu.memory_space<vmem>>, vector<4x8x8xf32>
    tpu.vector_store %arg3[%c0_23, %c4_24, %c0_25], %20 {strides = array<i32>} : memref<4x16x16xf32, #tpu.memory_space<vmem>>, vector<4x8x8xf32>,
    %c2 = arith.constant 2 : index
    %c0_26 = arith.constant 0 : index
    %c0_27 = arith.constant 0 : index
    %c0_28 = arith.constant 0 : index
    %22 = vector.load %arg1[%c2, %c0_26, %c0_27, %c0_28] : memref<9x4x8x8xf32, #tpu.memory_space<vmem>>, vector<1x4x8x8xf32>
    %23 = vector.shape_cast %22 : vector<1x4x8x8xf32> to vector<4x8x8xf32>
    %c2_29 = arith.constant 2 : index
    %c0_30 = arith.constant 0 : index
    %c0_31 = arith.constant 0 : index
    %24 = vector.load %arg2[%c2_29, %c0_30, %c0_31] : memref<9x8x8xf32, #tpu.memory_space<vmem>>, vector<1x8x8xf32>
    %25 = vector.shape_cast %24 : vector<1x8x8xf32> to vector<8x8xf32>
    %26 = vector.shape_cast %25 : vector<8x8xf32> to vector<1x8x8xf32>
    %27 = vector.broadcast %26 : vector<1x8x8xf32> to vector<4x8x8xf32>
    %28 = arith.mulf %23, %27 : vector<4x8x8xf32>
    %c0_32 = arith.constant 0 : index
    %c8 = arith.constant 8 : index
    %c0_33 = arith.constant 0 : index
    %29 = vector.load %arg3[%c0_32, %c8, %c0_33] : memref<4x16x16xf32, #tpu.memory_space<vmem>>, vector<4x8x8xf32>
    %30 = arith.addf %29, %28 : vector<4x8x8xf32>
    %c0_34 = arith.constant 0 : index
    %c8_35 = arith.constant 8 : index
    %c0_36 = arith.constant 0 : index
    %31 = vector.load %arg3[%c0_34, %c8_35, %c0_36] : memref<4x16x16xf32, #tpu.memory_space<vmem>>, vector<4x8x8xf32>
    tpu.vector_store %arg3[%c0_34, %c8_35, %c0_36], %30 {strides = array<i32>} : memref<4x16x16xf32, #tpu.memory_space<vmem>>, vector<4x8x8xf32>,
    %c3 = arith.constant 3 : index
    %c0_37 = arith.constant 0 : index
    %c0_38 = arith.constant 0 : index
    %c0_39 = arith.constant 0 : index
    %32 = vector.load %arg1[%c3, %c0_37, %c0_38, %c0_39] : memref<9x4x8x8xf32, #tpu.memory_space<vmem>>, vector<1x4x8x8xf32>
    %33 = vector.shape_cast %32 : vector<1x4x8x8xf32> to vector<4x8x8xf32>
    %c3_40 = arith.constant 3 : index
    %c0_41 = arith.constant 0 : index
    %c0_42 = arith.constant 0 : index
    %34 = vector.load %arg2[%c3_40, %c0_41, %c0_42] : memref<9x8x8xf32, #tpu.memory_space<vmem>>, vector<1x8x8xf32>
    %35 = vector.shape_cast %34 : vector<1x8x8xf32> to vector<8x8xf32>
    %36 = vector.shape_cast %35 : vector<8x8xf32> to vector<1x8x8xf32>
    %37 = vector.broadcast %36 : vector<1x8x8xf32> to vector<4x8x8xf32>
    %38 = arith.mulf %33, %37 : vector<4x8x8xf32>
    %c0_43 = arith.constant 0 : index
    %c0_44 = arith.constant 0 : index
    %c4_45 = arith.constant 4 : index
    %39 = vector.load %arg3[%c0_43, %c0_44, %c4_45] : memref<4x16x16xf32, #tpu.memory_space<vmem>>, vector<4x8x8xf32>
    %40 = arith.addf %39, %38 : vector<4x8x8xf32>
    %c0_46 = arith.constant 0 : index
    %c0_47 = arith.constant 0 : index
    %c4_48 = arith.constant 4 : index
    %41 = vector.load %arg3[%c0_46, %c0_47, %c4_48] : memref<4x16x16xf32, #tpu.memory_space<vmem>>, vector<4x8x8xf32>
    tpu.vector_store %arg3[%c0_46, %c0_47, %c4_48], %40 {strides = array<i32>} : memref<4x16x16xf32, #tpu.memory_space<vmem>>, vector<4x8x8xf32>,
    %c4_49 = arith.constant 4 : index
    %c0_50 = arith.constant 0 : index
    %c0_51 = arith.constant 0 : index
    %c0_52 = arith.constant 0 : index
    %42 = vector.load %arg1[%c4_49, %c0_50, %c0_51, %c0_52] : memref<9x4x8x8xf32, #tpu.memory_space<vmem>>, vector<1x4x8x8xf32>
    %43 = vector.shape_cast %42 : vector<1x4x8x8xf32> to vector<4x8x8xf32>
    %c4_53 = arith.constant 4 : index
    %c0_54 = arith.constant 0 : index
    %c0_55 = arith.constant 0 : index
    %44 = vector.load %arg2[%c4_53, %c0_54, %c0_55] : memref<9x8x8xf32, #tpu.memory_space<vmem>>, vector<1x8x8xf32>
    %45 = vector.shape_cast %44 : vector<1x8x8xf32> to vector<8x8xf32>
    %46 = vector.shape_cast %45 : vector<8x8xf32> to vector<1x8x8xf32>
    %47 = vector.broadcast %46 : vector<1x8x8xf32> to vector<4x8x8xf32>
    %48 = arith.mulf %43, %47 : vector<4x8x8xf32>
    %c0_56 = arith.constant 0 : index
    %c4_57 = arith.constant 4 : index
    %c4_58 = arith.constant 4 : index
    %49 = vector.load %arg3[%c0_56, %c4_57, %c4_58] : memref<4x16x16xf32, #tpu.memory_space<vmem>>, vector<4x8x8xf32>
    %50 = arith.addf %49, %48 : vector<4x8x8xf32>
    %c0_59 = arith.constant 0 : index
    %c4_60 = arith.constant 4 : index
    %c4_61 = arith.constant 4 : index
    %51 = vector.load %arg3[%c0_59, %c4_60, %c4_61] : memref<4x16x16xf32, #tpu.memory_space<vmem>>, vector<4x8x8xf32>
    tpu.vector_store %arg3[%c0_59, %c4_60, %c4_61], %50 {strides = array<i32>} : memref<4x16x16xf32, #tpu.memory_space<vmem>>, vector<4x8x8xf32>,
    %c5 = arith.constant 5 : index
    %c0_62 = arith.constant 0 : index
    %c0_63 = arith.constant 0 : index
    %c0_64 = arith.constant 0 : index
    %52 = vector.load %arg1[%c5, %c0_62, %c0_63, %c0_64] : memref<9x4x8x8xf32, #tpu.memory_space<vmem>>, vector<1x4x8x8xf32>
    %53 = vector.shape_cast %52 : vector<1x4x8x8xf32> to vector<4x8x8xf32>
    %c5_65 = arith.constant 5 : index
    %c0_66 = arith.constant 0 : index
    %c0_67 = arith.constant 0 : index
    %54 = vector.load %arg2[%c5_65, %c0_66, %c0_67] : memref<9x8x8xf32, #tpu.memory_space<vmem>>, vector<1x8x8xf32>
    %55 = vector.shape_cast %54 : vector<1x8x8xf32> to vector<8x8xf32>
    %56 = vector.shape_cast %55 : vector<8x8xf32> to vector<1x8x8xf32>
    %57 = vector.broadcast %56 : vector<1x8x8xf32> to vector<4x8x8xf32>
    %58 = arith.mulf %53, %57 : vector<4x8x8xf32>
    %c0_68 = arith.constant 0 : index
    %c8_69 = arith.constant 8 : index
    %c4_70 = arith.constant 4 : index
    %59 = vector.load %arg3[%c0_68, %c8_69, %c4_70] : memref<4x16x16xf32, #tpu.memory_space<vmem>>, vector<4x8x8xf32>
    %60 = arith.addf %59, %58 : vector<4x8x8xf32>
    %c0_71 = arith.constant 0 : index
    %c8_72 = arith.constant 8 : index
    %c4_73 = arith.constant 4 : index
    %61 = vector.load %arg3[%c0_71, %c8_72, %c4_73] : memref<4x16x16xf32, #tpu.memory_space<vmem>>, vector<4x8x8xf32>
    tpu.vector_store %arg3[%c0_71, %c8_72, %c4_73], %60 {strides = array<i32>} : memref<4x16x16xf32, #tpu.memory_space<vmem>>, vector<4x8x8xf32>,
    %c6 = arith.constant 6 : index
    %c0_74 = arith.constant 0 : index
    %c0_75 = arith.constant 0 : index
    %c0_76 = arith.constant 0 : index
    %62 = vector.load %arg1[%c6, %c0_74, %c0_75, %c0_76] : memref<9x4x8x8xf32, #tpu.memory_space<vmem>>, vector<1x4x8x8xf32>
    %63 = vector.shape_cast %62 : vector<1x4x8x8xf32> to vector<4x8x8xf32>
    %c6_77 = arith.constant 6 : index
    %c0_78 = arith.constant 0 : index
    %c0_79 = arith.constant 0 : index
    %64 = vector.load %arg2[%c6_77, %c0_78, %c0_79] : memref<9x8x8xf32, #tpu.memory_space<vmem>>, vector<1x8x8xf32>
    %65 = vector.shape_cast %64 : vector<1x8x8xf32> to vector<8x8xf32>
    %66 = vector.shape_cast %65 : vector<8x8xf32> to vector<1x8x8xf32>
    %67 = vector.broadcast %66 : vector<1x8x8xf32> to vector<4x8x8xf32>
    %68 = arith.mulf %63, %67 : vector<4x8x8xf32>
    %c0_80 = arith.constant 0 : index
    %c0_81 = arith.constant 0 : index
    %c8_82 = arith.constant 8 : index
    %69 = vector.load %arg3[%c0_80, %c0_81, %c8_82] : memref<4x16x16xf32, #tpu.memory_space<vmem>>, vector<4x8x8xf32>
    %70 = arith.addf %69, %68 : vector<4x8x8xf32>
    %c0_83 = arith.constant 0 : index
    %c0_84 = arith.constant 0 : index
    %c8_85 = arith.constant 8 : index
    %71 = vector.load %arg3[%c0_83, %c0_84, %c8_85] : memref<4x16x16xf32, #tpu.memory_space<vmem>>, vector<4x8x8xf32>
    tpu.vector_store %arg3[%c0_83, %c0_84, %c8_85], %70 {strides = array<i32>} : memref<4x16x16xf32, #tpu.memory_space<vmem>>, vector<4x8x8xf32>,
    %c7 = arith.constant 7 : index
    %c0_86 = arith.constant 0 : index
    %c0_87 = arith.constant 0 : index
    %c0_88 = arith.constant 0 : index
    %72 = vector.load %arg1[%c7, %c0_86, %c0_87, %c0_88] : memref<9x4x8x8xf32, #tpu.memory_space<vmem>>, vector<1x4x8x8xf32>
    %73 = vector.shape_cast %72 : vector<1x4x8x8xf32> to vector<4x8x8xf32>
    %c7_89 = arith.constant 7 : index
    %c0_90 = arith.constant 0 : index
    %c0_91 = arith.constant 0 : index
    %74 = vector.load %arg2[%c7_89, %c0_90, %c0_91] : memref<9x8x8xf32, #tpu.memory_space<vmem>>, vector<1x8x8xf32>
    %75 = vector.shape_cast %74 : vector<1x8x8xf32> to vector<8x8xf32>
    %76 = vector.shape_cast %75 : vector<8x8xf32> to vector<1x8x8xf32>
    %77 = vector.broadcast %76 : vector<1x8x8xf32> to vector<4x8x8xf32>
    %78 = arith.mulf %73, %77 : vector<4x8x8xf32>
    %c0_92 = arith.constant 0 : index
    %c4_93 = arith.constant 4 : index
    %c8_94 = arith.constant 8 : index
    %79 = vector.load %arg3[%c0_92, %c4_93, %c8_94] : memref<4x16x16xf32, #tpu.memory_space<vmem>>, vector<4x8x8xf32>
    %80 = arith.addf %79, %78 : vector<4x8x8xf32>
    %c0_95 = arith.constant 0 : index
    %c4_96 = arith.constant 4 : index
    %c8_97 = arith.constant 8 : index
    %81 = vector.load %arg3[%c0_95, %c4_96, %c8_97] : memref<4x16x16xf32, #tpu.memory_space<vmem>>, vector<4x8x8xf32>
    tpu.vector_store %arg3[%c0_95, %c4_96, %c8_97], %80 {strides = array<i32>} : memref<4x16x16xf32, #tpu.memory_space<vmem>>, vector<4x8x8xf32>,
    %c8_98 = arith.constant 8 : index
    %c0_99 = arith.constant 0 : index
    %c0_100 = arith.constant 0 : index
    %c0_101 = arith.constant 0 : index
    %82 = vector.load %arg1[%c8_98, %c0_99, %c0_100, %c0_101] : memref<9x4x8x8xf32, #tpu.memory_space<vmem>>, vector<1x4x8x8xf32>
    %83 = vector.shape_cast %82 : vector<1x4x8x8xf32> to vector<4x8x8xf32>
    %c8_102 = arith.constant 8 : index
    %c0_103 = arith.constant 0 : index
    %c0_104 = arith.constant 0 : index
    %84 = vector.load %arg2[%c8_102, %c0_103, %c0_104] : memref<9x8x8xf32, #tpu.memory_space<vmem>>, vector<1x8x8xf32>
    %85 = vector.shape_cast %84 : vector<1x8x8xf32> to vector<8x8xf32>
    %86 = vector.shape_cast %85 : vector<8x8xf32> to vector<1x8x8xf32>
    %87 = vector.broadcast %86 : vector<1x8x8xf32> to vector<4x8x8xf32>
    %88 = arith.mulf %83, %87 : vector<4x8x8xf32>
    %c0_105 = arith.constant 0 : index
    %c8_106 = arith.constant 8 : index
    %c8_107 = arith.constant 8 : index
    %89 = vector.load %arg3[%c0_105, %c8_106, %c8_107] : memref<4x16x16xf32, #tpu.memory_space<vmem>>, vector<4x8x8xf32>
    %90 = arith.addf %89, %88 : vector<4x8x8xf32>
    %c0_108 = arith.constant 0 : index
    %c8_109 = arith.constant 8 : index
    %c8_110 = arith.constant 8 : index
    %91 = vector.load %arg3[%c0_108, %c8_109, %c8_110] : memref<4x16x16xf32, #tpu.memory_space<vmem>>, vector<4x8x8xf32>
    tpu.vector_store %arg3[%c0_108, %c8_109, %c8_110], %90 {strides = array<i32>} : memref<4x16x16xf32, #tpu.memory_space<vmem>>, vector<4x8x8xf32>,
    %c0_111 = arith.constant 0 : index
    %c0_112 = arith.constant 0 : index
    %c0_113 = arith.constant 0 : index
    %92 = vector.load %arg3[%c0_111, %c0_112, %c0_113] : memref<4x16x16xf32, #tpu.memory_space<vmem>>, vector<4x16x16xf32>
    %cst_114 = arith.constant -1.000000e+00 : f32
    %cst_115 = arith.constant 1.000000e+00 : f32
    %93 = vector.broadcast %cst_114 : f32 to vector<4x16x16xf32>
    %94 = arith.maximumf %93, %92 : vector<4x16x16xf32>
    %95 = vector.broadcast %cst_115 : f32 to vector<4x16x16xf32>
    %96 = arith.minimumf %95, %94 : vector<4x16x16xf32>
    %c0_116 = arith.constant 0 : index
    %c0_117 = arith.constant 0 : index
    %c0_118 = arith.constant 0 : index
    %97 = vector.load %arg3[%c0_116, %c0_117, %c0_118] : memref<4x16x16xf32, #tpu.memory_space<vmem>>, vector<4x16x16xf32>
    tpu.vector_store %arg3[%c0_116, %c0_117, %c0_118], %96 {strides = array<i32>} : memref<4x16x16xf32, #tpu.memory_space<vmem>>, vector<4x16x16xf32>,
    return
  }
  func.func @transform_0(%arg0: i32) -> (i32, i32, i32, i32) {
    %c0_i32 = arith.constant 0 : i32
    %c0_i32_0 = arith.constant 0 : i32
    %c0_i32_1 = arith.constant 0 : i32
    %c0_i32_2 = arith.constant 0 : i32
    return %c0_i32, %arg0, %c0_i32_0, %c0_i32_1 : i32, i32, i32, i32
  }
  func.func @transform_1(%arg0: i32) -> (i32, i32, i32) {
    %c0_i32 = arith.constant 0 : i32
    %c0_i32_0 = arith.constant 0 : i32
    %c0_i32_1 = arith.constant 0 : i32
    %c0_i32_2 = arith.constant 0 : i32
    return %c0_i32, %c0_i32_0, %c0_i32_1 : i32, i32, i32
  }
  func.func @transform_2(%arg0: i32) -> (i32, i32, i32) {
    %c0_i32 = arith.constant 0 : i32
    %c0_i32_0 = arith.constant 0 : i32
    %c0_i32_1 = arith.constant 0 : i32
    return %arg0, %c0_i32, %c0_i32_0 : i32, i32, i32
  }
}

</mosaic_0001>

<llo_original>
// kernel: tpu_custom_call.1
$region0: #{tpu_custom_call.1}
  #allocation0 [shape = 'u32[]', space=smem, size = 0x4, offset = 0x4, fixed_abs, tag = 'smem constant byte address 0x4 - core index']
  #allocation1 [shape = 'u32[144,128]{1,0:T(1,128)}', space=vmem, size = 0x12000, scoped, tag = 'internal scratch']
  %s0 = inlined_call_operand.vmem [shape: f32[9,8,8,8], index: 0, kind: input, shape index: {}]
  %s1 = inlined_call_operand.vmem [shape: f32[9,8,8], index: 1, kind: input, shape index: {}]
  %s2 = inlined_call_operand.hbm [shape: f32[8,16,16], index: 2, kind: output, shape index: {}]
  %s3 = sld [smem:[#allocation0]]
  $region79: #{tpu_custom_call.1} parent=0
    _
  %s5 = ssub.s32 1, %s3
  %s6 = scalar_select 0, %s5, %s3
  $region1: #{tpu_custom_call.1} parent=0
    #allocation2 [shape = 'u8[294912]{0}', space=vmem, size = 0x48000, scoped, tag = 'input window, operand 0']
    #allocation3 [shape = 'u8[65536]{0}', space=vmem, size = 0x10000, scoped, tag = 'output window, operand 0']
    #allocation4 [shape = 's32[2]{0}', space=sflag, size = 0x8, scoped, tag = 'scoped memory for tpu_custom_call.1']
    %7 = vsyncpa [#allocation4], 0
    %s8 = scalar_lea.sflag [#allocation4], 1
    %9 = vsyncpa %s8, 0
    loop: start=0, step=1, limit=4
    $region2: #{tpu_custom_call.1} parent=1 // loop_pre_header
      _
    $region3: #{tpu_custom_call.1} parent=1 // loop_header
      %s11 = sphi 0, %s15
      %p12 = scmp.ge.s32.totalorder %s11, 4
      %s21 = sphi 0, %s23
      %s24 = sphi 0, %s21
      %s25 = sphi 0, %s24
      %s41 = sphi 0, %s25
      %s45 = sphi 0, %s45
      %s47 = sphi 0, %s45
      %s48 = sphi 0, %s47
      %s62 = sphi 0, %s48
      %s68 = sphi 0, %s70
      %s71 = sphi 0, %s68
      %s72 = sphi 0, %s71
      %s88 = sphi 0, %s72
    $region4: #{tpu_custom_call.1} parent=1 // loop_header_branch
      %14 = sbr.rel (%p12) target = $region8
    $region5: #{tpu_custom_call.1} parent=1 // loop_body
      %s16 = ssub.s32 %s11, 1
      %s17 = ssub.s32 %s11, 2
      %s18 = sadd.s32 %s11, 1
      %s19 = ssub.s32 %s11, %s18
      %p20 = scmp.eq.s32.totalorder %s19, 0
      %s22 = sadd.s32 %s21, 1
      %s23 = scalar_select %p20, %s21, %s22
      %p26 = pneg %p20
      %p27 = scmp.eq.s32.totalorder %s11, 1
      %p28 = por %p26, %p27
      %p29 = scmp.ne.s32.totalorder %s21, %s24
      %p30 = scmp.eq.s32.totalorder %s11, 0
      %p31 = por %p29, %p30
      %p32 = scmp.ne.s32.totalorder %s21, %s24
      %p33 = scmp.eq.s32.totalorder %s16, 1
      %p34 = por %p32, %p33
      %p35 = scmp.ne.s32.totalorder %s24, %s25
      %p36 = scmp.eq.s32.totalorder %s16, 0
      %p37 = por %p35, %p36
      %p38 = scmp.ne.s32.totalorder %s24, %s25
      %p39 = scmp.eq.s32.totalorder %s17, 1
      %p40 = por %p38, %p39
      %p42 = scmp.ne.s32.totalorder %s25, %s41
      %p43 = scmp.eq.s32.totalorder %s17, 0
      %p44 = por %p42, %p43
      %s46 = sadd.s32 %s45, 1
      %p49 = scmp.eq.s32.totalorder %s11, 1
      %p50 = scmp.ne.s32.totalorder %s45, %s47
      %p51 = scmp.eq.s32.totalorder %s11, 0
      %p52 = por %p50, %p51
      %p53 = scmp.ne.s32.totalorder %s45, %s47
      %p54 = scmp.eq.s32.totalorder %s16, 1
      %p55 = por %p53, %p54
      %p56 = scmp.ne.s32.totalorder %s47, %s48
      %p57 = scmp.eq.s32.totalorder %s16, 0
      %p58 = por %p56, %p57
      %p59 = scmp.ne.s32.totalorder %s47, %s48
      %p60 = scmp.eq.s32.totalorder %s17, 1
      %p61 = por %p59, %p60
      %p63 = scmp.ne.s32.totalorder %s48, %s62
      %p64 = scmp.eq.s32.totalorder %s17, 0
      %p65 = por %p63, %p64
      %s66 = ssub.s32 %s11, %s18
      %p67 = scmp.eq.s32.totalorder %s66, 0
      %s69 = sadd.s32 %s68, 1
      %s70 = scalar_select %p67, %s68, %s69
      %p73 = pneg %p67
      %p74 = scmp.eq.s32.totalorder %s11, 1
      %p75 = por %p73, %p74
      %p76 = scmp.ne.s32.totalorder %s68, %s71
      %p77 = scmp.eq.s32.totalorder %s11, 0
      %p78 = por %p76, %p77
      %p79 = scmp.ne.s32.totalorder %s68, %s71
      %p80 = scmp.eq.s32.totalorder %s16, 1
      %p81 = por %p79, %p80
      %p82 = scmp.ne.s32.totalorder %s71, %s72
      %p83 = scmp.eq.s32.totalorder %s16, 0
      %p84 = por %p82, %p83
      %p85 = scmp.ne.s32.totalorder %s71, %s72
      %p86 = scmp.eq.s32.totalorder %s17, 1
      %p87 = por %p85, %p86
      %p89 = scmp.ne.s32.totalorder %s72, %s88
      %p90 = scmp.eq.s32.totalorder %s17, 0
      %p91 = por %p89, %p90
      %p92 = scmp.le.s32.totalorder 1, %s11
      %p93 = scmp.lt.s32.totalorder %s11, 3
      %p94 = pnand %p92, %p93
      %p95 = pneg %p94
      // Predicated region
      $region9: #{tpu_custom_call.1} parent=5 // pred_check
        _
      $region10: #{tpu_custom_call.1} parent=5 // pred_check_branch
        %97 = sbr.rel (%p94) target = $region12
      $region11: #{tpu_custom_call.1} parent=5 // pred_region
        %s98 = ssub.s32 %s11, 1
        // Predicated region
        $region13: #{tpu_custom_call.1} parent=11 // pred_check
          %p99 = pneg %p58
        $region14: #{tpu_custom_call.1} parent=11 // pred_check_branch
          %101 = sbr.rel (%p99) target = $region16
        $region15: #{tpu_custom_call.1} parent=11 // pred_region
          _
        $region16: #{tpu_custom_call.1} parent=11 // pred_fallthru
          _
      $region12: #{tpu_custom_call.1} parent=5 // pred_fallthru
        _
      %p102 = scmp.lt.s32.totalorder %s11, 2
      // Predicated region
      $region17: #{tpu_custom_call.1} parent=5 // pred_check
        %p103 = pneg %p102
      $region18: #{tpu_custom_call.1} parent=5 // pred_check_branch
        %105 = sbr.rel (%p103) target = $region20
      $region19: #{tpu_custom_call.1} parent=5 // pred_region
        // Predicated region
        $region21: #{tpu_custom_call.1} parent=19 // pred_check
          %p106 = pneg %p31
        $region22: #{tpu_custom_call.1} parent=19 // pred_check_branch
          %108 = sbr.rel (%p106) target = $region24
        $region23: #{tpu_custom_call.1} parent=19 // pred_region
          %s109 = sand.u32 %s21, 1
          %s110 = sand.u32 %s21, 1
          %s111 = smul.addr %s110, 288
          %s112 = scalar_lea.vmem [#allocation2], %s111
          %s113 = smul.u32 4, %s11
          %s114 = smul.addr %s113, 8
          %s115 = scalar_lea.vmem %s0, %s114
          // Predicated region
          $region25: #{tpu_custom_call.1} parent=23 // pred_check
            _
          $region26: #{tpu_custom_call.1} parent=23 // pred_check_branch
            %117 = sbr.rel (0) target = $region28
          $region27: #{tpu_custom_call.1} parent=23 // pred_region
            // Predicated region
            $region29: #{tpu_custom_call.1} parent=27 // pred_check
              _
            $region30: #{tpu_custom_call.1} parent=27 // pred_check_branch
              %119 = sbr.rel (0) target = $region32
            $region31: #{tpu_custom_call.1} parent=27 // pred_region
              // Predicated region
              $region44: #{tpu_custom_call.1} parent=31 // pred_check
                _
              $region45: #{tpu_custom_call.1} parent=31 // pred_check_branch
                %204 = sbr.rel (0) target = $region47
              $region46: #{tpu_custom_call.1} parent=31 // pred_region
                loop: start=0, step=1, limit=1
                $region48: #{tpu_custom_call.1} parent=46 // loop_pre_header
                  _
                $region49: #{tpu_custom_call.1} parent=46 // loop_header
                  %s206 = sphi 0, %s210
                  %p207 = scmp.ge.s32.totalorder %s206, 1
                  %s211 = sphi %s115, %s115
                  %s212 = sphi %s112, %s112
                $region50: #{tpu_custom_call.1} parent=46 // loop_header_branch
                  %209 = sbr.rel (%p207) target = $region54
                $region51: #{tpu_custom_call.1} parent=46 // loop_body
                  %v213 = vld [vmem:[%s211] sm:$0xff]
                  %214 = vst [vmem:[%s212] sm:$0xff] %v213
                  %v215 = vld [vmem:[%s211 + $0x8] sm:$0xff]
                  %216 = vst [vmem:[%s212 + $0x8] sm:$0xff] %v215
                  %v217 = vld [vmem:[%s211 + $0x10] sm:$0xff]
                  %218 = vst [vmem:[%s212 + $0x10] sm:$0xff] %v217
                  %v219 = vld [vmem:[%s211 + $0x18] sm:$0xff]
                  %220 = vst [vmem:[%s212 + $0x18] sm:$0xff] %v219
                  %v221 = vld [vmem:[%s211 + $0x40] sm:$0xff]
                  %222 = vst [vmem:[%s212 + $0x20] sm:$0xff] %v221
                  %v223 = vld [vmem:[%s211 + $0x48] sm:$0xff]
                  %224 = vst [vmem:[%s212 + $0x28] sm:$0xff] %v223
                  %v225 = vld [vmem:[%s211 + $0x50] sm:$0xff]
                  %226 = vst [vmem:[%s212 + $0x30] sm:$0xff] %v225
                  %v227 = vld [vmem:[%s211 + $0x58] sm:$0xff]
                  %228 = vst [vmem:[%s212 + $0x38] sm:$0xff] %v227
                  %v229 = vld [vmem:[%s211 + $0x80] sm:$0xff]
                  %230 = vst [vmem:[%s212 + $0x40] sm:$0xff] %v229
                  %v231 = vld [vmem:[%s211 + $0x88] sm:$0xff]
                  %232 = vst [vmem:[%s212 + $0x48] sm:$0xff] %v231
                  %v233 = vld [vmem:[%s211 + $0x90] sm:$0xff]
                  %234 = vst [vmem:[%s212 + $0x50] sm:$0xff] %v233
                  %v235 = vld [vmem:[%s211 + $0x98] sm:$0xff]
                  %236 = vst [vmem:[%s212 + $0x58] sm:$0xff] %v235
                  %v237 = vld [vmem:[%s211 + $0xc0] sm:$0xff]
                  %238 = vst [vmem:[%s212 + $0x60] sm:$0xff] %v237
                  %v239 = vld [vmem:[%s211 + $0xc8] sm:$0xff]
                  %240 = vst [vmem:[%s212 + $0x68] sm:$0xff] %v239
                  %v241 = vld [vmem:[%s211 + $0xd0] sm:$0xff]
                  %242 = vst [vmem:[%s212 + $0x70] sm:$0xff] %v241
                  %v243 = vld [vmem:[%s211 + $0xd8] sm:$0xff]
                  %244 = vst [vmem:[%s212 + $0x78] sm:$0xff] %v243
                  %v245 = vld [vmem:[%s211 + $0x100] sm:$0xff]
                  %246 = vst [vmem:[%s212 + $0x80] sm:$0xff] %v245
                  %v247 = vld [vmem:[%s211 + $0x108] sm:$0xff]
                  %248 = vst [vmem:[%s212 + $0x88] sm:$0xff] %v247
                  %v249 = vld [vmem:[%s211 + $0x110] sm:$0xff]
                  %250 = vst [vmem:[%s212 + $0x90] sm:$0xff] %v249
                  %v251 = vld [vmem:[%s211 + $0x118] sm:$0xff]
                  %252 = vst [vmem:[%s212 + $0x98] sm:$0xff] %v251
                  %v253 = vld [vmem:[%s211 + $0x140] sm:$0xff]
                  %254 = vst [vmem:[%s212 + $0xa0] sm:$0xff] %v253
                  %v255 = vld [vmem:[%s211 + $0x148] sm:$0xff]
                  %256 = vst [vmem:[%s212 + $0xa8] sm:$0xff] %v255
                  %v257 = vld [vmem:[%s211 + $0x150] sm:$0xff]
                  %258 = vst [vmem:[%s212 + $0xb0] sm:$0xff] %v257
                  %v259 = vld [vmem:[%s211 + $0x158] sm:$0xff]
                  %260 = vst [vmem:[%s212 + $0xb8] sm:$0xff] %v259
                  %v261 = vld [vmem:[%s211 + $0x180] sm:$0xff]
                  %262 = vst [vmem:[%s212 + $0xc0] sm:$0xff] %v261
                  %v263 = vld [vmem:[%s211 + $0x188] sm:$0xff]
                  %264 = vst [vmem:[%s212 + $0xc8] sm:$0xff] %v263
                  %v265 = vld [vmem:[%s211 + $0x190] sm:$0xff]
                  %266 = vst [vmem:[%s212 + $0xd0] sm:$0xff] %v265
                  %v267 = vld [vmem:[%s211 + $0x198] sm:$0xff]
                  %268 = vst [vmem:[%s212 + $0xd8] sm:$0xff] %v267
                  %v269 = vld [vmem:[%s211 + $0x1c0] sm:$0xff]
                  %270 = vst [vmem:[%s212 + $0xe0] sm:$0xff] %v269
                  %v271 = vld [vmem:[%s211 + $0x1c8] sm:$0xff]
                  %272 = vst [vmem:[%s212 + $0xe8] sm:$0xff] %v271
                  %v273 = vld [vmem:[%s211 + $0x1d0] sm:$0xff]
                  %274 = vst [vmem:[%s212 + $0xf0] sm:$0xff] %v273
                  %v275 = vld [vmem:[%s211 + $0x1d8] sm:$0xff]
                  %276 = vst [vmem:[%s212 + $0xf8] sm:$0xff] %v275
                  %v277 = vld [vmem:[%s211 + $0x200] sm:$0xff]
                  %278 = vst [vmem:[%s212 + $0x100] sm:$0xff] %v277
                  %v279 = vld [vmem:[%s211 + $0x208] sm:$0xff]
                  %280 = vst [vmem:[%s212 + $0x108] sm:$0xff] %v279
                  %v281 = vld [vmem:[%s211 + $0x210] sm:$0xff]
                  %282 = vst [vmem:[%s212 + $0x110] sm:$0xff] %v281
                  %v283 = vld [vmem:[%s211 + $0x218] sm:$0xff]
                  %284 = vst [vmem:[%s212 + $0x118] sm:$0xff] %v283
                $region52: #{tpu_custom_call.1} parent=46 // loop_footer
                  %s210 = sadd.s32 1, %s206
                $region53: #{tpu_custom_call.1} parent=46 // loop_footer_branch
                  %205 = sbr.rel target = $region49
                $region54: #{tpu_custom_call.1} parent=46 // loop_exit
                  _
              $region47: #{tpu_custom_call.1} parent=31 // pred_fallthru
                _
              // Predicated region
              $region55: #{tpu_custom_call.1} parent=31 // pred_check
                _
              $region56: #{tpu_custom_call.1} parent=31 // pred_check_branch
                %286 = sbr.rel target = $region58
              $region57: #{tpu_custom_call.1} parent=31 // pred_region
                _
              $region58: #{tpu_custom_call.1} parent=31 // pred_fallthru
                _
            $region32: #{tpu_custom_call.1} parent=27 // pred_fallthru
              _
            // Predicated region
            $region33: #{tpu_custom_call.1} parent=27 // pred_check
              _
            $region34: #{tpu_custom_call.1} parent=27 // pred_check_branch
              %121 = sbr.rel target = $region36
            $region35: #{tpu_custom_call.1} parent=27 // pred_region
              loop: start=0, step=1, limit=1
              $region37: #{tpu_custom_call.1} parent=35 // loop_pre_header
                _
              $region38: #{tpu_custom_call.1} parent=35 // loop_header
                %s124 = sphi 0, %s128
                %p125 = scmp.ge.s32.totalorder %s124, 1
                %s129 = sphi %s115, %s115
                %s130 = sphi %s112, %s112
              $region39: #{tpu_custom_call.1} parent=35 // loop_header_branch
                %127 = sbr.rel (%p125) target = $region43
              $region40: #{tpu_custom_call.1} parent=35 // loop_body
                %v131 = vld [vmem:[%s129] sm:$0xff]
                %132 = vst [vmem:[%s130] sm:$0xff] %v131
                %v133 = vld [vmem:[%s129 + $0x8] sm:$0xff]
                %134 = vst [vmem:[%s130 + $0x8] sm:$0xff] %v133
                %v135 = vld [vmem:[%s129 + $0x10] sm:$0xff]
                %136 = vst [vmem:[%s130 + $0x10] sm:$0xff] %v135
                %v137 = vld [vmem:[%s129 + $0x18] sm:$0xff]
                %138 = vst [vmem:[%s130 + $0x18] sm:$0xff] %v137
                %v139 = vld [vmem:[%s129 + $0x40] sm:$0xff]
                %140 = vst [vmem:[%s130 + $0x20] sm:$0xff] %v139
                %v141 = vld [vmem:[%s129 + $0x48] sm:$0xff]
                %142 = vst [vmem:[%s130 + $0x28] sm:$0xff] %v141
                %v143 = vld [vmem:[%s129 + $0x50] sm:$0xff]
                %144 = vst [vmem:[%s130 + $0x30] sm:$0xff] %v143
                %v145 = vld [vmem:[%s129 + $0x58] sm:$0xff]
                %146 = vst [vmem:[%s130 + $0x38] sm:$0xff] %v145
                %v147 = vld [vmem:[%s129 + $0x80] sm:$0xff]
                %148 = vst [vmem:[%s130 + $0x40] sm:$0xff] %v147
                %v149 = vld [vmem:[%s129 + $0x88] sm:$0xff]
                %150 = vst [vmem:[%s130 + $0x48] sm:$0xff] %v149
                %v151 = vld [vmem:[%s129 + $0x90] sm:$0xff]
                %152 = vst [vmem:[%s130 + $0x50] sm:$0xff] %v151
                %v153 = vld [vmem:[%s129 + $0x98] sm:$0xff]
                %154 = vst [vmem:[%s130 + $0x58] sm:$0xff] %v153
                %v155 = vld [vmem:[%s129 + $0xc0] sm:$0xff]
                %156 = vst [vmem:[%s130 + $0x60] sm:$0xff] %v155
                %v157 = vld [vmem:[%s129 + $0xc8] sm:$0xff]
                %158 = vst [vmem:[%s130 + $0x68] sm:$0xff] %v157
                %v159 = vld [vmem:[%s129 + $0xd0] sm:$0xff]
                %160 = vst [vmem:[%s130 + $0x70] sm:$0xff] %v159
                %v161 = vld [vmem:[%s129 + $0xd8] sm:$0xff]
                %162 = vst [vmem:[%s130 + $0x78] sm:$0xff] %v161
                %v163 = vld [vmem:[%s129 + $0x100] sm:$0xff]
                %164 = vst [vmem:[%s130 + $0x80] sm:$0xff] %v163
                %v165 = vld [vmem:[%s129 + $0x108] sm:$0xff]
                %166 = vst [vmem:[%s130 + $0x88] sm:$0xff] %v165
                %v167 = vld [vmem:[%s129 + $0x110] sm:$0xff]
                %168 = vst [vmem:[%s130 + $0x90] sm:$0xff] %v167
                %v169 = vld [vmem:[%s129 + $0x118] sm:$0xff]
                %170 = vst [vmem:[%s130 + $0x98] sm:$0xff] %v169
                %v171 = vld [vmem:[%s129 + $0x140] sm:$0xff]
                %172 = vst [vmem:[%s130 + $0xa0] sm:$0xff] %v171
                %v173 = vld [vmem:[%s129 + $0x148] sm:$0xff]
                %174 = vst [vmem:[%s130 + $0xa8] sm:$0xff] %v173
                %v175 = vld [vmem:[%s129 + $0x150] sm:$0xff]
                %176 = vst [vmem:[%s130 + $0xb0] sm:$0xff] %v175
                %v177 = vld [vmem:[%s129 + $0x158] sm:$0xff]
                %178 = vst [vmem:[%s130 + $0xb8] sm:$0xff] %v177
                %v179 = vld [vmem:[%s129 + $0x180] sm:$0xff]
                %180 = vst [vmem:[%s130 + $0xc0] sm:$0xff] %v179
                %v181 = vld [vmem:[%s129 + $0x188] sm:$0xff]
                %182 = vst [vmem:[%s130 + $0xc8] sm:$0xff] %v181
                %v183 = vld [vmem:[%s129 + $0x190] sm:$0xff]
                %184 = vst [vmem:[%s130 + $0xd0] sm:$0xff] %v183
                %v185 = vld [vmem:[%s129 + $0x198] sm:$0xff]
                %186 = vst [vmem:[%s130 + $0xd8] sm:$0xff] %v185
                %v187 = vld [vmem:[%s129 + $0x1c0] sm:$0xff]
                %188 = vst [vmem:[%s130 + $0xe0] sm:$0xff] %v187
                %v189 = vld [vmem:[%s129 + $0x1c8] sm:$0xff]
                %190 = vst [vmem:[%s130 + $0xe8] sm:$0xff] %v189
                %v191 = vld [vmem:[%s129 + $0x1d0] sm:$0xff]
                %192 = vst [vmem:[%s130 + $0xf0] sm:$0xff] %v191
                %v193 = vld [vmem:[%s129 + $0x1d8] sm:$0xff]
                %194 = vst [vmem:[%s130 + $0xf8] sm:$0xff] %v193
                %v195 = vld [vmem:[%s129 + $0x200] sm:$0xff]
                %196 = vst [vmem:[%s130 + $0x100] sm:$0xff] %v195
                %v197 = vld [vmem:[%s129 + $0x208] sm:$0xff]
                %198 = vst [vmem:[%s130 + $0x108] sm:$0xff] %v197
                %v199 = vld [vmem:[%s129 + $0x210] sm:$0xff]
                %200 = vst [vmem:[%s130 + $0x110] sm:$0xff] %v199
                %v201 = vld [vmem:[%s129 + $0x218] sm:$0xff]
                %202 = vst [vmem:[%s130 + $0x118] sm:$0xff] %v201
              $region41: #{tpu_custom_call.1} parent=35 // loop_footer
                %s128 = sadd.s32 1, %s124
              $region42: #{tpu_custom_call.1} parent=35 // loop_footer_branch
                %123 = sbr.rel target = $region38
              $region43: #{tpu_custom_call.1} parent=35 // loop_exit
                _
            $region36: #{tpu_custom_call.1} parent=27 // pred_fallthru
              _
          $region28: #{tpu_custom_call.1} parent=23 // pred_fallthru
            _
          %287 = vnop
        $region24: #{tpu_custom_call.1} parent=19 // pred_fallthru
          _
      $region20: #{tpu_custom_call.1} parent=5 // pred_fallthru
        _
      %p288 = scmp.le.s32.totalorder 1, %s11
      %p289 = scmp.lt.s32.totalorder %s11, 3
      %p290 = pnand %p288, %p289
      %p291 = pneg %p290
      // Predicated region
      $region59: #{tpu_custom_call.1} parent=5 // pred_check
        _
      $region60: #{tpu_custom_call.1} parent=5 // pred_check_branch
        %293 = sbr.rel (%p290) target = $region62
      $region61: #{tpu_custom_call.1} parent=5 // pred_region
        %s294 = ssub.s32 %s11, 1
        %s295 = sand.u32 %s24, 1
        %s296 = sand.u32 %s24, 1
        %s297 = smul.addr %s296, 288
        %s298 = scalar_lea.vmem [#allocation2], %s297
        // Predicated region
        $region63: #{tpu_custom_call.1} parent=61 // pred_check
          %p299 = pneg %p37
        $region64: #{tpu_custom_call.1} parent=61 // pred_check_branch
          %301 = sbr.rel (%p299) target = $region66
        $region65: #{tpu_custom_call.1} parent=61 // pred_region
          _
        $region66: #{tpu_custom_call.1} parent=61 // pred_fallthru
          _
        %s302 = sand.u32 %s24, 1
        %s303 = sand.u32 %s24, 1
        %s304 = smul.addr %s303, 288
        %s305 = scalar_lea.vmem [#allocation2], %s304
        %p306 = pneg %p37
        %p307 = pneg %p34
        %p308 = pneg %p58
        %p309 = pneg %p55
        %p310 = pneg %p84
        %p311 = pneg %p81
        %s312 = sand.u32 %s71, 1
        %s313 = scalar_lea.sflag [#allocation4], %s312
        %s314 = sand.u32 %s71, 1
        %s315 = smul.addr %s314, 64
        %s316 = scalar_lea.vmem [#allocation3], %s315
        %s317 = smul.u32 4, %s16
        %s318 = smul.u32 4, %s16
        %vm319 = vcmask 130048
        %320 = vst.msk [vmem:[%s316] sm:$0xff] %vm319, 0.0
        %321 = vst.msk [vmem:[%s316 + $0x8] sm:$0xff] %vm319, 0.0
        %322 = vst.msk [vmem:[%s316 + $0x10] sm:$0xff] %vm319, 0.0
        %323 = vst.msk [vmem:[%s316 + $0x18] sm:$0xff] %vm319, 0.0
        %324 = vst.msk [vmem:[%s316 + $0x20] sm:$0xff] %vm319, 0.0
        %325 = vst.msk [vmem:[%s316 + $0x28] sm:$0xff] %vm319, 0.0
        %326 = vst.msk [vmem:[%s316 + $0x30] sm:$0xff] %vm319, 0.0
        %327 = vst.msk [vmem:[%s316 + $0x38] sm:$0xff] %vm319, 0.0
        %v328 = vld [vmem:[%s298] sm:$0xff]
        %v329 = vld [vmem:[%s298 + $0x8] sm:$0xff]
        %v330 = vld [vmem:[%s298 + $0x10] sm:$0xff]
        %v331 = vld [vmem:[%s298 + $0x18] sm:$0xff]
        %v332 = vld [vmem:[%s1] sm:$0xff]
        %v333 = vmul.f32 %v328, %v332
        %v334 = vmul.f32 %v329, %v332
        %v335 = vmul.f32 %v330, %v332
        %v336 = vmul.f32 %v331, %v332
        %v337 = vld [vmem:[%s316] sm:$0xff]
        %v338 = vld [vmem:[%s316 + $0x10] sm:$0xff]
        %v339 = vld [vmem:[%s316 + $0x20] sm:$0xff]
        %v340 = vld [vmem:[%s316 + $0x30] sm:$0xff]
        %v341 = vadd.f32 %v337, %v333
        %v342 = vadd.f32 %v338, %v334
        %v343 = vadd.f32 %v339, %v335
        %v344 = vadd.f32 %v340, %v336
        %vm345 = vcmask 64512
        %346 = vst.msk [vmem:[%s316] sm:$0xff] %vm345, %v341
        %347 = vst.msk [vmem:[%s316 + $0x10] sm:$0xff] %vm345, %v342
        %348 = vst.msk [vmem:[%s316 + $0x20] sm:$0xff] %vm345, %v343
        %349 = vst.msk [vmem:[%s316 + $0x30] sm:$0xff] %vm345, %v344
        %s350 = scalar_lea.vmem %s298, 32 [#allocation2]
        %v351 = vld [vmem:[%s350] sm:$0xff]
        %v352 = vld [vmem:[%s350 + $0x8] sm:$0xff]
        %v353 = vld [vmem:[%s350 + $0x10] sm:$0xff]
        %v354 = vld [vmem:[%s350 + $0x18] sm:$0xff]
        %s355 = scalar_lea.vmem %s1, 8
        %v356 = vld [vmem:[%s355] sm:$0xff]
        %v357 = vmul.f32 %v351, %v356
        %v358 = vmul.f32 %v352, %v356
        %v359 = vmul.f32 %v353, %v356
        %v360 = vmul.f32 %v354, %v356
        %v361 = vld [vmem:[%s316 + $0x4] sm:$0xff]
        %v362 = vld [vmem:[%s316 + $0x14] sm:$0xff]
        %v363 = vld [vmem:[%s316 + $0x24] sm:$0xff]
        %v364 = vld [vmem:[%s316 + $0x34] sm:$0xff]
        %v365 = vadd.f32 %v361, %v357
        %v366 = vadd.f32 %v362, %v358
        %v367 = vadd.f32 %v363, %v359
        %v368 = vadd.f32 %v364, %v360
        %369 = vst.msk [vmem:[%s316 + $0x4] sm:$0xff] %vm345, %v365
        %370 = vst.msk [vmem:[%s316 + $0x14] sm:$0xff] %vm345, %v366
        %371 = vst.msk [vmem:[%s316 + $0x24] sm:$0xff] %vm345, %v367
        %372 = vst.msk [vmem:[%s316 + $0x34] sm:$0xff] %vm345, %v368
        %s373 = scalar_lea.vmem %s298, 64 [#allocation2]
        %v374 = vld [vmem:[%s373] sm:$0xff]
        %v375 = vld [vmem:[%s373 + $0x8] sm:$0xff]
        %v376 = vld [vmem:[%s373 + $0x10] sm:$0xff]
        %v377 = vld [vmem:[%s373 + $0x18] sm:$0xff]
        %s378 = scalar_lea.vmem %s1, 16
        %v379 = vld [vmem:[%s378] sm:$0xff]
        %v380 = vmul.f32 %v374, %v379
        %v381 = vmul.f32 %v375, %v379
        %v382 = vmul.f32 %v376, %v379
        %v383 = vmul.f32 %v377, %v379
        %v384 = vld [vmem:[%s316 + $0x8] sm:$0xff]
        %v385 = vld [vmem:[%s316 + $0x18] sm:$0xff]
        %v386 = vld [vmem:[%s316 + $0x28] sm:$0xff]
        %v387 = vld [vmem:[%s316 + $0x38] sm:$0xff]
        %v388 = vadd.f32 %v384, %v380
        %v389 = vadd.f32 %v385, %v381
        %v390 = vadd.f32 %v386, %v382
        %v391 = vadd.f32 %v387, %v383
        %392 = vst.msk [vmem:[%s316 + $0x8] sm:$0xff] %vm345, %v388
        %393 = vst.msk [vmem:[%s316 + $0x18] sm:$0xff] %vm345, %v389
        %394 = vst.msk [vmem:[%s316 + $0x28] sm:$0xff] %vm345, %v390
        %395 = vst.msk [vmem:[%s316 + $0x38] sm:$0xff] %vm345, %v391
        %s396 = scalar_lea.vmem %s298, 96 [#allocation2]
        %v397 = vld [vmem:[%s396] sm:$0xff]
        %v398 = vld [vmem:[%s396 + $0x8] sm:$0xff]
        %v399 = vld [vmem:[%s396 + $0x10] sm:$0xff]
        %v400 = vld [vmem:[%s396 + $0x18] sm:$0xff]
        %s401 = scalar_lea.vmem %s1, 24
        %v402 = vld [vmem:[%s401] sm:$0xff]
        %v403 = vmul.f32 %v397, %v402
        %v404 = vmul.f32 %v398, %v402
        %v405 = vmul.f32 %v399, %v402
        %v406 = vmul.f32 %v400, %v402
        %v407 = vld [vmem:[%s316] sm:$0xff]
        %v408 = vld [vmem:[%s316 + $0x10] sm:$0xff]
        %v409 = vld [vmem:[%s316 + $0x20] sm:$0xff]
        %v410 = vld [vmem:[%s316 + $0x30] sm:$0xff]
        %415 = vrot.lane.b32.xlu0 %v403, 4
        %v416 = vpop.permute.xlu0 %415
        %417 = vrot.lane.b32.xlu0 %v404, 4
        %v418 = vpop.permute.xlu0 %417
        %419 = vrot.lane.b32.xlu0 %v405, 4
        %v420 = vpop.permute.xlu0 %419
        %421 = vrot.lane.b32.xlu0 %v406, 4
        %v422 = vpop.permute.xlu0 %421
        %v427 = vadd.f32 %v407, %v416
        %v428 = vadd.f32 %v408, %v418
        %v429 = vadd.f32 %v409, %v420
        %v430 = vadd.f32 %v410, %v422
        %vm431 = vcmask 97312
        %432 = vst.msk [vmem:[%s316] sm:$0xff] %vm431, %v427
        %433 = vst.msk [vmem:[%s316 + $0x10] sm:$0xff] %vm431, %v428
        %434 = vst.msk [vmem:[%s316 + $0x20] sm:$0xff] %vm431, %v429
        %435 = vst.msk [vmem:[%s316 + $0x30] sm:$0xff] %vm431, %v430
        %s436 = scalar_lea.vmem %s298, 128 [#allocation2]
        %v437 = vld [vmem:[%s436] sm:$0xff]
        %v438 = vld [vmem:[%s436 + $0x8] sm:$0xff]
        %v439 = vld [vmem:[%s436 + $0x10] sm:$0xff]
        %v440 = vld [vmem:[%s436 + $0x18] sm:$0xff]
        %s441 = scalar_lea.vmem %s1, 32
        %v442 = vld [vmem:[%s441] sm:$0xff]
        %v443 = vmul.f32 %v437, %v442
        %v444 = vmul.f32 %v438, %v442
        %v445 = vmul.f32 %v439, %v442
        %v446 = vmul.f32 %v440, %v442
        %v447 = vld [vmem:[%s316 + $0x4] sm:$0xff]
        %v448 = vld [vmem:[%s316 + $0x14] sm:$0xff]
        %v449 = vld [vmem:[%s316 + $0x24] sm:$0xff]
        %v450 = vld [vmem:[%s316 + $0x34] sm:$0xff]
        %455 = vrot.lane.b32.xlu0 %v443, 4
        %v456 = vpop.permute.xlu0 %455
        %457 = vrot.lane.b32.xlu0 %v444, 4
        %v458 = vpop.permute.xlu0 %457
        %459 = vrot.lane.b32.xlu0 %v445, 4
        %v460 = vpop.permute.xlu0 %459
        %461 = vrot.lane.b32.xlu0 %v446, 4
        %v462 = vpop.permute.xlu0 %461
        %v467 = vadd.f32 %v447, %v456
        %v468 = vadd.f32 %v448, %v458
        %v469 = vadd.f32 %v449, %v460
        %v470 = vadd.f32 %v450, %v462
        %471 = vst.msk [vmem:[%s316 + $0x4] sm:$0xff] %vm431, %v467
        %472 = vst.msk [vmem:[%s316 + $0x14] sm:$0xff] %vm431, %v468
        %473 = vst.msk [vmem:[%s316 + $0x24] sm:$0xff] %vm431, %v469
        %474 = vst.msk [vmem:[%s316 + $0x34] sm:$0xff] %vm431, %v470
        %s475 = scalar_lea.vmem %s298, 160 [#allocation2]
        %v476 = vld [vmem:[%s475] sm:$0xff]
        %v477 = vld [vmem:[%s475 + $0x8] sm:$0xff]
        %v478 = vld [vmem:[%s475 + $0x10] sm:$0xff]
        %v479 = vld [vmem:[%s475 + $0x18] sm:$0xff]
        %s480 = scalar_lea.vmem %s1, 40
        %v481 = vld [vmem:[%s480] sm:$0xff]
        %v482 = vmul.f32 %v476, %v481
        %v483 = vmul.f32 %v477, %v481
        %v484 = vmul.f32 %v478, %v481
        %v485 = vmul.f32 %v479, %v481
        %v486 = vld [vmem:[%s316 + $0x8] sm:$0xff]
        %v487 = vld [vmem:[%s316 + $0x18] sm:$0xff]
        %v488 = vld [vmem:[%s316 + $0x28] sm:$0xff]
        %v489 = vld [vmem:[%s316 + $0x38] sm:$0xff]
        %494 = vrot.lane.b32.xlu0 %v482, 4
        %v495 = vpop.permute.xlu0 %494
        %496 = vrot.lane.b32.xlu0 %v483, 4
        %v497 = vpop.permute.xlu0 %496
        %498 = vrot.lane.b32.xlu0 %v484, 4
        %v499 = vpop.permute.xlu0 %498
        %500 = vrot.lane.b32.xlu0 %v485, 4
        %v501 = vpop.permute.xlu0 %500
        %v506 = vadd.f32 %v486, %v495
        %v507 = vadd.f32 %v487, %v497
        %v508 = vadd.f32 %v488, %v499
        %v509 = vadd.f32 %v489, %v501
        %510 = vst.msk [vmem:[%s316 + $0x8] sm:$0xff] %vm431, %v506
        %511 = vst.msk [vmem:[%s316 + $0x18] sm:$0xff] %vm431, %v507
        %512 = vst.msk [vmem:[%s316 + $0x28] sm:$0xff] %vm431, %v508
        %513 = vst.msk [vmem:[%s316 + $0x38] sm:$0xff] %vm431, %v509
        %s514 = scalar_lea.vmem %s298, 192 [#allocation2]
        %v515 = vld [vmem:[%s514] sm:$0xff]
        %v516 = vld [vmem:[%s514 + $0x8] sm:$0xff]
        %v517 = vld [vmem:[%s514 + $0x10] sm:$0xff]
        %v518 = vld [vmem:[%s514 + $0x18] sm:$0xff]
        %s519 = scalar_lea.vmem %s1, 48
        %v520 = vld [vmem:[%s519] sm:$0xff]
        %v521 = vmul.f32 %v515, %v520
        %v522 = vmul.f32 %v516, %v520
        %v523 = vmul.f32 %v517, %v520
        %v524 = vmul.f32 %v518, %v520
        %v525 = vld [vmem:[%s316] sm:$0xff]
        %v526 = vld [vmem:[%s316 + $0x10] sm:$0xff]
        %v527 = vld [vmem:[%s316 + $0x20] sm:$0xff]
        %v528 = vld [vmem:[%s316 + $0x30] sm:$0xff]
        %533 = vrot.lane.b32.xlu0 %v521, 8
        %v534 = vpop.permute.xlu0 %533
        %535 = vrot.lane.b32.xlu0 %v522, 8
        %v536 = vpop.permute.xlu0 %535
        %537 = vrot.lane.b32.xlu0 %v523, 8
        %v538 = vpop.permute.xlu0 %537
        %539 = vrot.lane.b32.xlu0 %v524, 8
        %v540 = vpop.permute.xlu0 %539
        %v545 = vadd.f32 %v525, %v534
        %v546 = vadd.f32 %v526, %v536
        %v547 = vadd.f32 %v527, %v538
        %v548 = vadd.f32 %v528, %v540
        %vm549 = vcmask 130112
        %550 = vst.msk [vmem:[%s316] sm:$0xff] %vm549, %v545
        %551 = vst.msk [vmem:[%s316 + $0x10] sm:$0xff] %vm549, %v546
        %552 = vst.msk [vmem:[%s316 + $0x20] sm:$0xff] %vm549, %v547
        %553 = vst.msk [vmem:[%s316 + $0x30] sm:$0xff] %vm549, %v548
        %s554 = scalar_lea.vmem %s298, 224 [#allocation2]
        %v555 = vld [vmem:[%s554] sm:$0xff]
        %v556 = vld [vmem:[%s554 + $0x8] sm:$0xff]
        %v557 = vld [vmem:[%s554 + $0x10] sm:$0xff]
        %v558 = vld [vmem:[%s554 + $0x18] sm:$0xff]
        %s559 = scalar_lea.vmem %s1, 56
        %v560 = vld [vmem:[%s559] sm:$0xff]
        %v561 = vmul.f32 %v555, %v560
        %v562 = vmul.f32 %v556, %v560
        %v563 = vmul.f32 %v557, %v560
        %v564 = vmul.f32 %v558, %v560
        %v565 = vld [vmem:[%s316 + $0x4] sm:$0xff]
        %v566 = vld [vmem:[%s316 + $0x14] sm:$0xff]
        %v567 = vld [vmem:[%s316 + $0x24] sm:$0xff]
        %v568 = vld [vmem:[%s316 + $0x34] sm:$0xff]
        %573 = vrot.lane.b32.xlu0 %v561, 8
        %v574 = vpop.permute.xlu0 %573
        %575 = vrot.lane.b32.xlu0 %v562, 8
        %v576 = vpop.permute.xlu0 %575
        %577 = vrot.lane.b32.xlu0 %v563, 8
        %v578 = vpop.permute.xlu0 %577
        %579 = vrot.lane.b32.xlu0 %v564, 8
        %v580 = vpop.permute.xlu0 %579
        %v585 = vadd.f32 %v565, %v574
        %v586 = vadd.f32 %v566, %v576
        %v587 = vadd.f32 %v567, %v578
        %v588 = vadd.f32 %v568, %v580
        %589 = vst.msk [vmem:[%s316 + $0x4] sm:$0xff] %vm549, %v585
        %590 = vst.msk [vmem:[%s316 + $0x14] sm:$0xff] %vm549, %v586
        %591 = vst.msk [vmem:[%s316 + $0x24] sm:$0xff] %vm549, %v587
        %592 = vst.msk [vmem:[%s316 + $0x34] sm:$0xff] %vm549, %v588
        %s593 = scalar_lea.vmem %s298, 256 [#allocation2]
        %v594 = vld [vmem:[%s593] sm:$0xff]
        %v595 = vld [vmem:[%s593 + $0x8] sm:$0xff]
        %v596 = vld [vmem:[%s593 + $0x10] sm:$0xff]
        %v597 = vld [vmem:[%s593 + $0x18] sm:$0xff]
        %s598 = scalar_lea.vmem %s1, 64
        %v599 = vld [vmem:[%s598] sm:$0xff]
        %v600 = vmul.f32 %v594, %v599
        %v601 = vmul.f32 %v595, %v599
        %v602 = vmul.f32 %v596, %v599
        %v603 = vmul.f32 %v597, %v599
        %v604 = vld [vmem:[%s316 + $0x8] sm:$0xff]
        %v605 = vld [vmem:[%s316 + $0x18] sm:$0xff]
        %v606 = vld [vmem:[%s316 + $0x28] sm:$0xff]
        %v607 = vld [vmem:[%s316 + $0x38] sm:$0xff]
        %612 = vrot.lane.b32.xlu0 %v600, 8
        %v613 = vpop.permute.xlu0 %612
        %614 = vrot.lane.b32.xlu0 %v601, 8
        %v615 = vpop.permute.xlu0 %614
        %616 = vrot.lane.b32.xlu0 %v602, 8
        %v617 = vpop.permute.xlu0 %616
        %618 = vrot.lane.b32.xlu0 %v603, 8
        %v619 = vpop.permute.xlu0 %618
        %v624 = vadd.f32 %v604, %v613
        %v625 = vadd.f32 %v605, %v615
        %v626 = vadd.f32 %v606, %v617
        %v627 = vadd.f32 %v607, %v619
        %628 = vst.msk [vmem:[%s316 + $0x8] sm:$0xff] %vm549, %v624
        %629 = vst.msk [vmem:[%s316 + $0x18] sm:$0xff] %vm549, %v625
        %630 = vst.msk [vmem:[%s316 + $0x28] sm:$0xff] %vm549, %v626
        %631 = vst.msk [vmem:[%s316 + $0x38] sm:$0xff] %vm549, %v627
        %v632 = vld [vmem:[%s316] sm:$0xff]
        %v633 = vld [vmem:[%s316 + $0x8] sm:$0xff]
        %v634 = vld [vmem:[%s316 + $0x10] sm:$0xff]
        %v635 = vld [vmem:[%s316 + $0x18] sm:$0xff]
        %v636 = vld [vmem:[%s316 + $0x20] sm:$0xff]
        %v637 = vld [vmem:[%s316 + $0x28] sm:$0xff]
        %v638 = vld [vmem:[%s316 + $0x30] sm:$0xff]
        %v639 = vld [vmem:[%s316 + $0x38] sm:$0xff]
        %v640 = vmax.f32 %v632, -1.0
        %v641 = vmax.f32 %v633, -1.0
        %v642 = vmax.f32 %v634, -1.0
        %v643 = vmax.f32 %v635, -1.0
        %v644 = vmax.f32 %v636, -1.0
        %v645 = vmax.f32 %v637, -1.0
        %v646 = vmax.f32 %v638, -1.0
        %v647 = vmax.f32 %v639, -1.0
        %v648 = vmin.f32 %v640, 1.0
        %v649 = vmin.f32 %v641, 1.0
        %v650 = vmin.f32 %v642, 1.0
        %v651 = vmin.f32 %v643, 1.0
        %v652 = vmin.f32 %v644, 1.0
        %v653 = vmin.f32 %v645, 1.0
        %v654 = vmin.f32 %v646, 1.0
        %v655 = vmin.f32 %v647, 1.0
        %656 = vst.msk [vmem:[%s316] sm:$0xff] %vm319, %v648
        %657 = vst.msk [vmem:[%s316 + $0x8] sm:$0xff] %vm319, %v649
        %658 = vst.msk [vmem:[%s316 + $0x10] sm:$0xff] %vm319, %v650
        %659 = vst.msk [vmem:[%s316 + $0x18] sm:$0xff] %vm319, %v651
        %660 = vst.msk [vmem:[%s316 + $0x20] sm:$0xff] %vm319, %v652
        %661 = vst.msk [vmem:[%s316 + $0x28] sm:$0xff] %vm319, %v653
        %662 = vst.msk [vmem:[%s316 + $0x30] sm:$0xff] %vm319, %v654
        %663 = vst.msk [vmem:[%s316 + $0x38] sm:$0xff] %vm319, %v655
        %s664 = sand.u32 %s71, 1
        %s665 = scalar_lea.sflag [#allocation4], %s664
        %s666 = sand.u32 %s71, 1
        %s667 = smul.addr %s666, 64
        %s668 = scalar_lea.vmem [#allocation3], %s667
        // Predicated region
        $region67: #{tpu_custom_call.1} parent=61 // pred_check
          %p669 = pneg %p81
        $region68: #{tpu_custom_call.1} parent=61 // pred_check_branch
          %671 = sbr.rel (%p669) target = $region70
        $region69: #{tpu_custom_call.1} parent=61 // pred_region
          %s672 = smul.u32 4, %s16
          %s674 = ssub.s32 1024, 1024
          %675 = vsyncadd %s665, %s674
          %s676 = smul.addr %s672, 2
          %s677 = smul.addr %s676, 128
          %s678 = scalar_lea.hbm %s2, %s677
          %s679 = sshll.u32 %s668, 4
          %s680 = int_to_ptr.vmem [resolvable:$true] %s679
          %685 = dma.vmem_to_hbm [thread:$0]  %s680, 1024, %s678, %s665, 128, 128, 8
        $region70: #{tpu_custom_call.1} parent=61 // pred_fallthru
          _
      $region62: #{tpu_custom_call.1} parent=5 // pred_fallthru
        _
      %p686 = scmp.le.s32.totalorder 2, %s11
      // Predicated region
      $region71: #{tpu_custom_call.1} parent=5 // pred_check
        %p687 = pneg %p686
      $region72: #{tpu_custom_call.1} parent=5 // pred_check_branch
        %689 = sbr.rel (%p687) target = $region74
      $region73: #{tpu_custom_call.1} parent=5 // pred_region
        %s690 = ssub.s32 %s11, 2
        // Predicated region
        $region75: #{tpu_custom_call.1} parent=73 // pred_check
          %p691 = pneg %p87
        $region76: #{tpu_custom_call.1} parent=73 // pred_check_branch
          %693 = sbr.rel (%p691) target = $region78
        $region77: #{tpu_custom_call.1} parent=73 // pred_region
          %s694 = sand.u32 %s72, 1
          %s695 = scalar_lea.sflag [#allocation4], %s694
          %s696 = sand.u32 %s72, 1
          %s697 = smul.addr %s696, 64
          %s698 = scalar_lea.vmem [#allocation3], %s697
          %699 = dma.done %s695, 1024
        $region78: #{tpu_custom_call.1} parent=73 // pred_fallthru
          _
      $region74: #{tpu_custom_call.1} parent=5 // pred_fallthru
        _
    $region6: #{tpu_custom_call.1} parent=1 // loop_footer
      %s15 = sadd.s32 1, %s11
    $region7: #{tpu_custom_call.1} parent=1 // loop_footer_branch
      %10 = sbr.rel target = $region3
    $region8: #{tpu_custom_call.1} parent=1 // loop_exit
      _
    %700 = vsyncpa [#allocation4], 1
    %s701 = scalar_lea.sflag [#allocation4], 1
    %702 = vsyncpa %s701, 1

</llo_original>
